<compile_context>
chip_gen: v7x
topology: tpu7x:2x2x1
jax: 0.10.0
libtpu: 0.0.40
codegen_flags: <defaults>
</compile_context>

<pallas_src>
import functools

import jax
import jax.numpy as jnp
from jax.experimental import pallas as pl
from jax.experimental.pallas import tpu as pltpu

LANE = 128


def _round_up(a, m):
    return (a + m - 1) // m * m


def _vmem_capacity_bytes():
    try:
        return int(pltpu.get_tpu_info().vmem_capacity_bytes)
    except Exception:
        return 64 * 1024 * 1024  # v7x per-TC VMEM: safe lower bound


# --------------------------------------------------------------------------
# Call 1: streaming global average pool  (N, C, S) bf16 -> (N, C) f32
# --------------------------------------------------------------------------
def _pool_kernel(x_ref, out_ref, acc_ref, *, block_s, cw, n_chunks, s_total,
                 inv_s):
    s_idx = pl.program_id(1)

    @pl.when(s_idx == 0)
    def _init():
        acc_ref[...] = jnp.zeros_like(acc_ref)

    need_mask = (s_total % block_s) != 0  # static: only the last block is ragged
    if need_mask:
        base = s_idx * block_s
        lane = jax.lax.broadcasted_iota(jnp.int32, (1, 1, cw), 2)

    def body(j, carry):
        start = pl.multiple_of(j * cw, cw)
        # Lane-tile-aligned 128-wide chunk: pure vld + VPU add, no relayout,
        # cast per chunk (never materialize the whole block in f32).
        chunk = x_ref[:, :, pl.ds(start, cw)].astype(jnp.float32)
        if need_mask:
            chunk = jnp.where(base + start + lane < s_total, chunk, 0.0)
        acc_ref[...] += chunk
        return carry

    jax.lax.fori_loop(0, n_chunks, body, 0, unroll=min(n_chunks, 8))

    @pl.when(s_idx == pl.num_programs(1) - 1)
    def _finish():
        # Single cross-lane (XLU) reduce per C-chunk for the whole stream.
        out_ref[...] = (jnp.sum(acc_ref[...], axis=-1) * inv_s).astype(
            out_ref.dtype)


def _global_avg_pool(x3, *, max_block_elems=None):
    """x3: (N, C, S) activation dtype (typically bf16). Returns (N, C) f32."""
    N, C, S = x3.shape
    itemsize = x3.dtype.itemsize
    cw = LANE if S >= LANE else S  # chunk width along S

    # C tiling: enables the second TensorCore (parallel axis) and bounds the
    # accumulator at large C.  A non-full Ct must be a multiple of 128 (lane
    # dim of the pooled output).
    if C % 256 == 0 and C > 256:
        ct = 256
    elif C % 128 == 0 and C > 128:
        ct = 128
    else:
        ct = C
    nc = C // ct

    vmem_cap = _vmem_capacity_bytes()
    vmem_limit = min(int(vmem_cap * 0.85), 100 * 1024 * 1024)

    acc_bytes = N * ct * cw * 4
    fixed = acc_bytes + 2 * N * ct * 4 + (2 << 20)
    per_buf = (vmem_limit - fixed) // 2                    # x is double-buffered
    per_buf = max(min(per_buf, 8 * 1024 * 1024), N * ct * cw * itemsize)
    block_s = max(cw, (per_buf // (N * ct * itemsize)) // cw * cw)
    block_s = min(block_s, _round_up(S, cw))
    if max_block_elems is not None:
        block_s = max(cw, min(block_s, max_block_elems // cw * cw))
    ns = pl.cdiv(S, block_s)
    n_chunks = block_s // cw

    kernel = functools.partial(_pool_kernel, block_s=block_s, cw=cw,
                               n_chunks=n_chunks, s_total=S, inv_s=1.0 / S)

    return pl.pallas_call(
        kernel,
        out_shape=jax.ShapeDtypeStruct((N, C), jnp.float32),
        grid=(nc, ns),
        in_specs=[pl.BlockSpec((N, ct, block_s), lambda c, s: (0, c, s))],
        out_specs=pl.BlockSpec((N, ct), lambda c, s: (0, c)),
        scratch_shapes=[pltpu.VMEM((N, ct, cw), jnp.float32)],
        compiler_params=pltpu.CompilerParams(
            dimension_semantics=("parallel", "arbitrary"),
            vmem_limit_bytes=vmem_limit),
        cost_estimate=pl.CostEstimate(
            flops=N * C * S, transcendentals=0,
            bytes_accessed=N * C * S * itemsize + N * C * 4),
    )(x3)


# --------------------------------------------------------------------------
# Call 2: MLP epilogue  pooled (N, C) -> Linear -> BN(train) -> ReLU -> Linear
# --------------------------------------------------------------------------
def _mlp_kernel(p_ref, w1_ref, b1_ref, g_ref, bt_ref, w2_ref, b2_ref, out_ref):
    pooled = p_ref[...].astype(jnp.bfloat16)

    # Linear 1 (MXU, bf16 inputs, f32 accumulation).
    h = jnp.dot(pooled, w1_ref[...],
                preferred_element_type=jnp.float32) + b1_ref[...]

    # BatchNorm1d, training mode: batch mean, biased variance, eps=1e-5 (f32).
    mu = jnp.mean(h, axis=0, keepdims=True)
    d = h - mu
    var = jnp.mean(d * d, axis=0, keepdims=True)
    h = d * jax.lax.rsqrt(var + 1e-5) * g_ref[...] + bt_ref[...]

    # ReLU.
    h = jnp.maximum(h, 0.0)

    # Linear 2 (MXU).
    out = jnp.dot(h.astype(jnp.bfloat16), w2_ref[...],
                  preferred_element_type=jnp.float32) + b2_ref[...]
    out_ref[...] = out.astype(out_ref.dtype)


def _mlp_head(pooled, w1, b1, gamma, beta, w2, b2):
    N, C = pooled.shape
    hidden = w1.shape[1]
    out_size = w2.shape[1]
    hp = _round_up(hidden, LANE)
    op = _round_up(out_size, LANE)

    bf16, f32 = jnp.bfloat16, jnp.float32
    # Inert padding: zero weight columns + zero bias => padded pre-activations
    # are exactly 0, BN of those columns is 0*rsqrt(eps)*1 + 0 = 0, and padded
    # w2 rows contribute nothing.  Weights live in VMEM as bf16 (MXU native).
    w1p = jnp.pad(w1, ((0, 0), (0, hp - hidden))).astype(bf16)
    b1p = jnp.pad(b1, (0, hp - hidden)).astype(f32).reshape(1, hp)
    gp = jnp.pad(gamma, (0, hp - hidden),
                 constant_values=1.0).astype(f32).reshape(1, hp)
    bp = jnp.pad(beta, (0, hp - hidden)).astype(f32).reshape(1, hp)
    w2p = jnp.pad(w2, ((0, hp - hidden), (0, op - out_size))).astype(bf16)
    b2p = jnp.pad(b2, (0, op - out_size)).astype(f32).reshape(1, op)

    vmem_limit = min(int(_vmem_capacity_bytes() * 0.85), 100 * 1024 * 1024)

    out = pl.pallas_call(
        _mlp_kernel,
        out_shape=jax.ShapeDtypeStruct((N, op), jnp.float32),
        compiler_params=pltpu.CompilerParams(vmem_limit_bytes=vmem_limit),
        cost_estimate=pl.CostEstimate(
            flops=2 * N * C * hp + 2 * N * hp * op + 10 * N * hp,
            transcendentals=hp,
            bytes_accessed=(N * C * 4 + w1p.size * 2 + w2p.size * 2
                            + 4 * hp * 4 + op * 4 + N * op * 4)),
    )(pooled, w1p, b1p, gp, bp, w2p, b2p)
    return out[:, :out_size]


# --------------------------------------------------------------------------
# Public entry point
# --------------------------------------------------------------------------
def projector_head(x, w1, b1, gamma, beta, w2, b2, *, x_dtype=jnp.bfloat16,
                   max_block_elems=None):
    """x: (N, C, D, H, W). Weights stored (in, out): y = x @ W + b.

    Returns (N, out_size) float32.
    """
    N, C = x.shape[0], x.shape[1]
    S = x.shape[2] * x.shape[3] * x.shape[4]
    x3 = x.reshape(N, C, S).astype(x_dtype)     # quantize-once; streamed as bf16
    pooled = _global_avg_pool(x3, max_block_elems=max_block_elems)
    return _mlp_head(pooled, w1, b1, gamma, beta, w2, b2)


def _reference(x, w1, b1, gamma, beta, w2, b2, x_dtype=jnp.bfloat16):
    """Pure-JAX reference with the same bf16-activation contract."""
    N, C = x.shape[0], x.shape[1]
    xq = x.astype(x_dtype).astype(jnp.float32)
    pooled = jnp.mean(xq.reshape(N, C, -1), axis=-1)
    h = pooled @ w1 + b1
    mu = jnp.mean(h, axis=0, keepdims=True)
    var = jnp.mean((h - mu) ** 2, axis=0, keepdims=True)
    h = (h - mu) / jnp.sqrt(var + 1e-5) * gamma + beta
    h = jnp.maximum(h, 0.0)
    return h @ w2 + b2


if __name__ == "__main__":
    # Small deterministic shapes.  S = 216 (not a multiple of 128) plus
    # max_block_elems=128 forces 2 S-blocks with a masked ragged tail, so the
    # accumulate/init/finalize and masking paths are all exercised.
    N, C, D, H, W = 4, 8, 6, 6, 6          # in_channels = 8, S = 216
    hidden, out_size = 32, 16

    key = jax.random.PRNGKey(0)
    kx, k1, k2, k3, k4, k5, k6 = jax.random.split(key, 7)

    x = jax.random.normal(kx, (N, C, D, H, W), dtype=jnp.float32)

    # Linear weights stored already transposed: (in, out), so y = x @ W + b.
    w1 = jax.random.normal(k1, (C, hidden), dtype=jnp.float32) * 0.5
    b1 = jax.random.normal(k2, (hidden,), dtype=jnp.float32) * 0.1
    gamma = 1.0 + 0.1 * jax.random.normal(k5, (hidden,), dtype=jnp.float32)
    beta = 0.1 * jax.random.normal(k6, (hidden,), dtype=jnp.float32)
    w2 = jax.random.normal(k3, (hidden, out_size), dtype=jnp.float32) * 0.1
    b2 = jax.random.normal(k4, (out_size,), dtype=jnp.float32) * 0.1

    out = projector_head(x, w1, b1, gamma, beta, w2, b2, max_block_elems=128)
    out = jax.block_until_ready(out)

    ref = _reference(x, w1, b1, gamma, beta, w2, b2)
    assert out.shape == (N, out_size)
    max_err = jnp.max(jnp.abs(out - ref))
    assert jnp.allclose(out, ref, atol=2e-2, rtol=2e-2), (
        f"mismatch vs reference, max abs err = {max_err}")

    print("KERNEL_OK")
</pallas_src>

<mosaic_0001>
module attributes {stable_mosaic.version = 11 : i64} {
  func.func @_pool_kernel(%arg0: i32, %arg1: i32, %arg2: memref<4x8x128xbf16, #tpu.memory_space<vmem>>, %arg3: memref<4x8xf32, #tpu.memory_space<vmem>>, %arg4: memref<4x8x128xf32, #tpu.memory_space<vmem>>) attributes {dimension_semantics = [#tpu.dimension_semantics<parallel>, #tpu.dimension_semantics<arbitrary>], iteration_bounds = array<i64: 1, 2>, scalar_prefetch = 0 : i64, scratch_operands = 1 : i64, tpu.core_type = #tpu.core_type<tc>, window_params = [{transform_indices = @transform_0, window_bounds = array<i64: 4, 8, 128>}, {transform_indices = @transform_1, window_bounds = array<i64: 4, 8>}]} {
    %c0_i32 = arith.constant 0 : i32
    %0 = arith.cmpi eq, %arg1, %c0_i32 : i32
    %1 = arith.extui %0 : i1 to i32
    %c0_i32_0 = arith.constant 0 : i32
    %2 = arith.cmpi ne, %1, %c0_i32_0 : i32
    scf.if %2 {
      %cst_12 = arith.constant 0.000000e+00 : f32
      %25 = vector.broadcast %cst_12 : f32 to vector<4x8x128xf32>
      %c0_13 = arith.constant 0 : index
      %c0_14 = arith.constant 0 : index
      %c0_15 = arith.constant 0 : index
      %26 = vector.load %arg4[%c0_13, %c0_14, %c0_15] : memref<4x8x128xf32, #tpu.memory_space<vmem>>, vector<4x8x128xf32>
      tpu.vector_store %arg4[%c0_13, %c0_14, %c0_15], %25 {strides = array<i32>} : memref<4x8x128xf32, #tpu.memory_space<vmem>>, vector<4x8x128xf32>,
    } else {
    }
    %c128_i32 = arith.constant 128 : i32
    %3 = arith.muli %arg1, %c128_i32 : i32
    %4 = tpu.iota {dimensions = array<i32: 2>} : vector<1x1x128xi32>
    %c0_i32_1 = arith.constant 0 : i32
    %c128_i32_2 = arith.constant 128 : i32
    %5 = arith.muli %c0_i32_1, %c128_i32_2 : i32
    %6 = tpu.assume_multiple %5, 128 : i32
    %c0 = arith.constant 0 : index
    %c0_3 = arith.constant 0 : index
    %7 = arith.index_cast %6 : i32 to index
    %8 = vector.load %arg2[%c0, %c0_3, %7] : memref<4x8x128xbf16, #tpu.memory_space<vmem>>, vector<4x8x128xbf16>
    %9 = arith.extf %8 : vector<4x8x128xbf16> to vector<4x8x128xf32>
    %10 = arith.addi %3, %6 : i32
    %11 = vector.broadcast %10 : i32 to vector<1x1x128xi32>
    %12 = arith.addi %11, %4 : vector<1x1x128xi32>
    %c216_i32 = arith.constant 216 : i32
    %13 = vector.broadcast %c216_i32 : i32 to vector<1x1x128xi32>
    %14 = arith.cmpi slt, %12, %13 : vector<1x1x128xi32>
    %cst = arith.constant 0.000000e+00 : f32
    %15 = vector.shape_cast %14 : vector<1x1x128xi1> to vector<1x1x128xi1>
    %16 = vector.broadcast %15 : vector<1x1x128xi1> to vector<4x8x128xi1>
    %17 = vector.broadcast %cst : f32 to vector<4x8x128xf32>
    %18 = arith.select %16, %9, %17 : vector<4x8x128xi1>, vector<4x8x128xf32>
    %c0_4 = arith.constant 0 : index
    %c0_5 = arith.constant 0 : index
    %c0_6 = arith.constant 0 : index
    %19 = vector.load %arg4[%c0_4, %c0_5, %c0_6] : memref<4x8x128xf32, #tpu.memory_space<vmem>>, vector<4x8x128xf32>
    %20 = arith.addf %19, %18 : vector<4x8x128xf32>
    %c0_7 = arith.constant 0 : index
    %c0_8 = arith.constant 0 : index
    %c0_9 = arith.constant 0 : index
    %21 = vector.load %arg4[%c0_7, %c0_8, %c0_9] : memref<4x8x128xf32, #tpu.memory_space<vmem>>, vector<4x8x128xf32>
    tpu.vector_store %arg4[%c0_7, %c0_8, %c0_9], %20 {strides = array<i32>} : memref<4x8x128xf32, #tpu.memory_space<vmem>>, vector<4x8x128xf32>,
    %c1_i32 = arith.constant 1 : i32
    %c1_i32_10 = arith.constant 1 : i32
    %22 = arith.cmpi eq, %arg1, %c1_i32_10 : i32
    %23 = arith.extui %22 : i1 to i32
    %c0_i32_11 = arith.constant 0 : i32
    %24 = arith.cmpi ne, %23, %c0_i32_11 : i32
    scf.if %24 {
      %c0_12 = arith.constant 0 : index
      %c0_13 = arith.constant 0 : index
      %c0_14 = arith.constant 0 : index
      %25 = vector.load %arg4[%c0_12, %c0_13, %c0_14] : memref<4x8x128xf32, #tpu.memory_space<vmem>>, vector<4x8x128xf32>
      %cst_15 = arith.constant dense<0.000000e+00> : vector<4x8xf32>
      %26 = vector.multi_reduction <add>, %25, %cst_15 [2] : vector<4x8x128xf32> to vector<4x8xf32>
      %cst_16 = arith.constant 0.00462962966 : f32
      %27 = vector.broadcast %cst_16 : f32 to vector<4x8xf32>
      %28 = arith.mulf %26, %27 : vector<4x8xf32>
      %c0_17 = arith.constant 0 : index
      %c0_18 = arith.constant 0 : index
      %29 = vector.load %arg3[%c0_17, %c0_18] : memref<4x8xf32, #tpu.memory_space<vmem>>, vector<4x8xf32>
      tpu.vector_store %arg3[%c0_17, %c0_18], %28 {strides = array<i32>} : memref<4x8xf32, #tpu.memory_space<vmem>>, vector<4x8xf32>,
    } else {
    }
    return
  }
  func.func @transform_0(%arg0: i32, %arg1: i32) -> (i32, i32, i32) {
    %c0_i32 = arith.constant 0 : i32
    %c0_i32_0 = arith.constant 0 : i32
    return %c0_i32, %arg0, %arg1 : i32, i32, i32
  }
  func.func @transform_1(%arg0: i32, %arg1: i32) -> (i32, i32) {
    %c0_i32 = arith.constant 0 : i32
    %c0_i32_0 = arith.constant 0 : i32
    return %c0_i32, %arg0 : i32, i32
  }
}

</mosaic_0001>

<llo_original>
// kernel: tpu_custom_call.1
$region0: #{tpu_custom_call.1}
  #allocation0 [shape = 'u32[]', space=smem, size = 0x4, offset = 0x4, fixed_abs, tag = 'smem constant byte address 0x4 - core index']
  #allocation1 [shape = 'u32[144,128]{1,0:T(1,128)}', space=vmem, size = 0x12000, scoped, tag = 'internal scratch']
  #allocation2 [shape = 'f32[4,8,128]{2,1,0:T(8,128)}', space=vmem, size = 0x4000, scoped, tag = 'scratch operand']
  %s0 = inlined_call_operand.hbm [shape: bf16[4,8,216], index: 0, kind: input, shape index: {}]
  %s1 = inlined_call_operand.hbm [shape: f32[4,8], index: 1, kind: output, shape index: {}]
  %s2 = sld [smem:[#allocation0]]
  $region49: #{tpu_custom_call.1} parent=0
    _
  %s4 = ssub.s32 1, %s2
  %s5 = scalar_select 0, %s4, %s2
  $region1: #{tpu_custom_call.1} parent=0
    #allocation3 [shape = 'u8[16384]{0}', space=vmem, size = 0x4000, scoped, tag = 'input window, operand 0']
    #allocation4 [shape = 's32[2]{0}', space=sflag, size = 0x8, scoped, tag = 'scoped memory for tpu_custom_call.1']
    #allocation5 [shape = 's32[2]{0}', space=sflag, size = 0x8, scoped, tag = 'scoped memory for tpu_custom_call.1']
    #allocation6 [shape = 'u8[2048]{0}', space=vmem, size = 0x800, scoped, tag = 'output window, operand 0, single buffered']
    %6 = vsyncpa [#allocation4], 0
    %s7 = scalar_lea.sflag [#allocation4], 1
    %8 = vsyncpa %s7, 0
    %9 = vsyncpa [#allocation5], 0
    loop: start=0, step=1, limit=4
    $region2: #{tpu_custom_call.1} parent=1 // loop_pre_header
      _
    $region3: #{tpu_custom_call.1} parent=1 // loop_header
      %s11 = sphi 0, %s15
      %p12 = scmp.ge.s32.totalorder %s11, 4
      %s18 = sphi 0, %s30
      %s19 = sphi 0, %s26
      %s20 = sphi 0, %s18
      %s21 = sphi 0, %s19
      %s22 = sphi 0, %s20
      %s23 = sphi 0, %s21
      %s35 = sphi 0, %s37
      %s38 = sphi 0, %s35
      %s39 = sphi 0, %s38
      %s55 = sphi 0, %s39
      %s61 = sphi 0, %s63
      %s64 = sphi 0, %s61
      %s65 = sphi 0, %s64
      %s81 = sphi 0, %s65
    $region4: #{tpu_custom_call.1} parent=1 // loop_header_branch
      %14 = sbr.rel (%p12) target = $region8
    $region5: #{tpu_custom_call.1} parent=1 // loop_body
      %s16 = ssub.s32 %s11, 1
      %s17 = ssub.s32 %s11, 2
      %s24 = sadd.s32 1, %s19
      %p25 = scmp.ge.s32.totalorder %s24, 2
      %s26 = scalar_select %p25, 0, %s24
      %s27 = sadd.s32 1, %s18
      %s28 = scalar_select %p25, %s27, %s18
      %p29 = scmp.ge.s32.totalorder %s28, 1
      %s30 = scalar_select %p29, 0, %s28
      %s31 = ssub.s32 %s18, %s30
      %s32 = ssub.s32 %s19, %s26
      %s33 = sor.u32 %s31, %s32
      %p34 = scmp.eq.s32.totalorder %s33, 0
      %s36 = sadd.s32 %s35, 1
      %s37 = scalar_select %p34, %s35, %s36
      %p40 = pneg %p34
      %p41 = scmp.eq.s32.totalorder %s11, 1
      %p42 = por %p40, %p41
      %p43 = scmp.ne.s32.totalorder %s35, %s38
      %p44 = scmp.eq.s32.totalorder %s11, 0
      %p45 = por %p43, %p44
      %p46 = scmp.ne.s32.totalorder %s35, %s38
      %p47 = scmp.eq.s32.totalorder %s16, 1
      %p48 = por %p46, %p47
      %p49 = scmp.ne.s32.totalorder %s38, %s39
      %p50 = scmp.eq.s32.totalorder %s16, 0
      %p51 = por %p49, %p50
      %p52 = scmp.ne.s32.totalorder %s38, %s39
      %p53 = scmp.eq.s32.totalorder %s17, 1
      %p54 = por %p52, %p53
      %p56 = scmp.ne.s32.totalorder %s39, %s55
      %p57 = scmp.eq.s32.totalorder %s17, 0
      %p58 = por %p56, %p57
      %s59 = ssub.s32 %s18, %s30
      %p60 = scmp.eq.s32.totalorder %s59, 0
      %s62 = sadd.s32 %s61, 1
      %s63 = scalar_select %p60, %s61, %s62
      %p66 = pneg %p60
      %p67 = scmp.eq.s32.totalorder %s11, 1
      %p68 = por %p66, %p67
      %p69 = scmp.ne.s32.totalorder %s61, %s64
      %p70 = scmp.eq.s32.totalorder %s11, 0
      %p71 = por %p69, %p70
      %p72 = scmp.ne.s32.totalorder %s61, %s64
      %p73 = scmp.eq.s32.totalorder %s16, 1
      %p74 = por %p72, %p73
      %p75 = scmp.ne.s32.totalorder %s64, %s65
      %p76 = scmp.eq.s32.totalorder %s16, 0
      %p77 = por %p75, %p76
      %p78 = scmp.ne.s32.totalorder %s64, %s65
      %p79 = scmp.eq.s32.totalorder %s17, 1
      %p80 = por %p78, %p79
      %p82 = scmp.ne.s32.totalorder %s65, %s81
      %p83 = scmp.eq.s32.totalorder %s17, 0
      %p84 = por %p82, %p83
      %p85 = scmp.le.s32.totalorder 1, %s11
      %p86 = scmp.lt.s32.totalorder %s11, 3
      %p87 = pnand %p85, %p86
      %p88 = pneg %p87
      // Predicated region
      $region9: #{tpu_custom_call.1} parent=5 // pred_check
        _
      $region10: #{tpu_custom_call.1} parent=5 // pred_check_branch
        %90 = sbr.rel (%p87) target = $region12
      $region11: #{tpu_custom_call.1} parent=5 // pred_region
        %s91 = ssub.s32 %s11, 1
      $region12: #{tpu_custom_call.1} parent=5 // pred_fallthru
        _
      %p92 = scmp.lt.s32.totalorder %s11, 2
      // Predicated region
      $region13: #{tpu_custom_call.1} parent=5 // pred_check
        %p93 = pneg %p92
      $region14: #{tpu_custom_call.1} parent=5 // pred_check_branch
        %95 = sbr.rel (%p93) target = $region16
      $region15: #{tpu_custom_call.1} parent=5 // pred_region
        // Predicated region
        $region17: #{tpu_custom_call.1} parent=15 // pred_check
          %p96 = pneg %p45
        $region18: #{tpu_custom_call.1} parent=15 // pred_check_branch
          %98 = sbr.rel (%p96) target = $region20
        $region19: #{tpu_custom_call.1} parent=15 // pred_region
          %s99 = sand.u32 %s35, 1
          %s100 = scalar_lea.sflag [#allocation4], %s99
          %s101 = sand.u32 %s35, 1
          %s102 = smul.addr %s101, 16
          %s103 = scalar_lea.vmem [#allocation3], %s102
          %s105 = ssub.s32 256, 256
          %106 = vsyncadd %s100, %s105
          %s107 = smul.addr %s18, 2
          %s108 = sadd.s32 %s19, %s107
          %s109 = smul.addr %s108, 64
          %s110 = scalar_lea.hbm %s0, %s109
          %s111 = sshll.u32 %s103, 4
          %s112 = int_to_ptr.vmem [resolvable:$true] %s111
          %117 = dma.hbm_to_vmem [thread:$0]  %s110, 256, %s112, %s100, 128, 64, 4
        $region20: #{tpu_custom_call.1} parent=15 // pred_fallthru
          _
      $region16: #{tpu_custom_call.1} parent=5 // pred_fallthru
        _
      %p118 = scmp.le.s32.totalorder 1, %s11
      %p119 = scmp.lt.s32.totalorder %s11, 3
      %p120 = pnand %p118, %p119
      %p121 = pneg %p120
      // Predicated region
      $region21: #{tpu_custom_call.1} parent=5 // pred_check
        _
      $region22: #{tpu_custom_call.1} parent=5 // pred_check_branch
        %123 = sbr.rel (%p120) target = $region24
      $region23: #{tpu_custom_call.1} parent=5 // pred_region
        %s124 = ssub.s32 %s11, 1
        %s125 = sand.u32 %s38, 1
        %s126 = scalar_lea.sflag [#allocation4], %s125
        %s127 = sand.u32 %s38, 1
        %s128 = smul.addr %s127, 16
        %s129 = scalar_lea.vmem [#allocation3], %s128
        // Predicated region
        $region25: #{tpu_custom_call.1} parent=23 // pred_check
          %p130 = pneg %p51
        $region26: #{tpu_custom_call.1} parent=23 // pred_check_branch
          %132 = sbr.rel (%p130) target = $region28
        $region27: #{tpu_custom_call.1} parent=23 // pred_region
          %133 = dma.done %s126, 256
        $region28: #{tpu_custom_call.1} parent=23 // pred_fallthru
          _
        %s134 = sand.u32 %s38, 1
        %s135 = scalar_lea.sflag [#allocation4], %s134
        %s136 = sand.u32 %s38, 1
        %s137 = smul.addr %s136, 16
        %s138 = scalar_lea.vmem [#allocation3], %s137
        %p139 = pneg %p51
        %p140 = pneg %p48
        %p141 = pneg %p77
        %p142 = pneg %p74
        %p143 = scmp.eq.s32.totalorder %s21, 0
        // Predicated region
        $region29: #{tpu_custom_call.1} parent=23 // pred_check
          %p144 = pneg %p143
        $region30: #{tpu_custom_call.1} parent=23 // pred_check_branch
          %146 = sbr.rel (%p144) target = $region32
        $region31: #{tpu_custom_call.1} parent=23 // pred_region
          %147 = vst [vmem:[#allocation2] sm:$0xff] 0.0
          %148 = vst [vmem:[#allocation2 + $0x8] sm:$0xff] 0.0
          %149 = vst [vmem:[#allocation2 + $0x10] sm:$0xff] 0.0
          %150 = vst [vmem:[#allocation2 + $0x18] sm:$0xff] 0.0
        $region32: #{tpu_custom_call.1} parent=23 // pred_fallthru
          _
        %s151 = smul.u32 %s21, 128
        %v152 = vlaneseq
        %v153 = vand.u32 %v152, 127
        %v154 = vld [vmem:[%s129] sm:$0xf]
        %v155 = vld [vmem:[%s129 + $0x4] sm:$0xf]
        %v156 = vld [vmem:[%s129 + $0x8] sm:$0xf]
        %v157 = vld [vmem:[%s129 + $0xc] sm:$0xf]
        %v158 = vunpack.c.l.bf16 %v154
        %v159 = vunpack.c.l.bf16 %v155
        %v160 = vunpack.c.l.bf16 %v156
        %v161 = vunpack.c.l.bf16 %v157
        %s162 = sadd.s32 %s151, 0
        %v163 = vstv %s162
        %v164 = vadd.s32 %v163, %v153
        %vm165 = vcmp.lt.s32.totalorder %v164, 216
        %v166 = vsel %vm165, 1, 0
        %vm167 = vcmp.eq.s32.totalorder %v166, 1
        %v168 = vsel %vm167, %v158, 0.0
        %v169 = vsel %vm167, %v159, 0.0
        %v170 = vsel %vm167, %v160, 0.0
        %v171 = vsel %vm167, %v161, 0.0
        %v172 = vld [vmem:[#allocation2] sm:$0xff]
        %v173 = vld [vmem:[#allocation2 + $0x8] sm:$0xff]
        %v174 = vld [vmem:[#allocation2 + $0x10] sm:$0xff]
        %v175 = vld [vmem:[#allocation2 + $0x18] sm:$0xff]
        %v176 = vadd.f32 %v172, %v168
        %v177 = vadd.f32 %v173, %v169
        %v178 = vadd.f32 %v174, %v170
        %v179 = vadd.f32 %v175, %v171
        %180 = vst [vmem:[#allocation2] sm:$0xff] %v176
        %181 = vst [vmem:[#allocation2 + $0x8] sm:$0xff] %v177
        %182 = vst [vmem:[#allocation2 + $0x10] sm:$0xff] %v178
        %183 = vst [vmem:[#allocation2 + $0x18] sm:$0xff] %v179
        %p184 = scmp.eq.s32.totalorder %s21, 1
        // Predicated region
        $region33: #{tpu_custom_call.1} parent=23 // pred_check
          %p185 = pneg %p184
        $region34: #{tpu_custom_call.1} parent=23 // pred_check_branch
          %187 = sbr.rel (%p185) target = $region36
        $region35: #{tpu_custom_call.1} parent=23 // pred_region
          %v188 = vld [vmem:[#allocation2] sm:$0xff]
          %v189 = vld [vmem:[#allocation2 + $0x8] sm:$0xff]
          %v190 = vld [vmem:[#allocation2 + $0x10] sm:$0xff]
          %v191 = vld [vmem:[#allocation2 + $0x18] sm:$0xff]
          %192 = vadd.xlane.f32.xlu0 %v188
          %v193 = vpop.xlane.xlu0 %192
          %194 = vadd.xlane.f32.xlu0 %v189
          %v195 = vpop.xlane.xlu0 %194
          %196 = vadd.xlane.f32.xlu0 %v190
          %v197 = vpop.xlane.xlu0 %196
          %198 = vadd.xlane.f32.xlu0 %v191
          %v199 = vpop.xlane.xlu0 %198
          %v200 = vmul.f32 %v193, 0.0046296297
          %v201 = vmul.f32 %v195, 0.0046296297
          %v202 = vmul.f32 %v197, 0.0046296297
          %v203 = vmul.f32 %v199, 0.0046296297
          %v208 = vlaneseq
          %v209 = vshrl.u32 %v208, 7
          %v210 = vsub.s32 %v153, %v209
          %v211 = vrot.slane %v200, %v210
          %v212 = vlaneseq
          %v213 = vshrl.u32 %v212, 7
          %v214 = vsub.s32 %v153, %v213
          %v215 = vrot.slane %v201, %v214
          %v216 = vlaneseq
          %v217 = vshrl.u32 %v216, 7
          %v218 = vsub.s32 %v153, %v217
          %v219 = vrot.slane %v202, %v218
          %v220 = vlaneseq
          %v221 = vshrl.u32 %v220, 7
          %v222 = vsub.s32 %v153, %v221
          %v223 = vrot.slane %v203, %v222
          %vm224 = vcmask 1041409
          %v225 = vsel %vm224, %v215, %v211
          %vm226 = vcmask 1042434
          %v227 = vsel %vm226, %v219, %v225
          %vm228 = vcmask 1043459
          %v229 = vsel %vm228, %v223, %v227
          %vm231 = vcmask 60416
          %232 = vst.msk [vmem:[#allocation6] sm:$0xf] %vm231, %v229
        $region36: #{tpu_custom_call.1} parent=23 // pred_fallthru
          _
        // Predicated region
        $region37: #{tpu_custom_call.1} parent=23 // pred_check
          %p233 = pneg %p74
        $region38: #{tpu_custom_call.1} parent=23 // pred_check_branch
          %235 = sbr.rel (%p233) target = $region40
        $region39: #{tpu_custom_call.1} parent=23 // pred_region
          %s237 = ssub.s32 64, 64
          %238 = vsyncadd [#allocation5], %s237
          %s239 = smul.addr %s20, 64
          %s240 = scalar_lea.hbm %s1, %s239
          %s242 = sshll.u32 [#allocation6], 4
          %s243 = int_to_ptr.vmem [resolvable:$true] %s242
          %245 = dma.vmem_to_hbm [thread:$0]  %s243, 64, %s240, [#allocation5]
        $region40: #{tpu_custom_call.1} parent=23 // pred_fallthru
          _
        // Predicated region
        $region41: #{tpu_custom_call.1} parent=23 // pred_check
          %p246 = pneg %p74
        $region42: #{tpu_custom_call.1} parent=23 // pred_check_branch
          %248 = sbr.rel (%p246) target = $region44
        $region43: #{tpu_custom_call.1} parent=23 // pred_region
          %249 = dma.done [#allocation5], 64
        $region44: #{tpu_custom_call.1} parent=23 // pred_fallthru
          _
      $region24: #{tpu_custom_call.1} parent=5 // pred_fallthru
        _
      %p250 = scmp.le.s32.totalorder 2, %s11
      // Predicated region
      $region45: #{tpu_custom_call.1} parent=5 // pred_check
        %p251 = pneg %p250
      $region46: #{tpu_custom_call.1} parent=5 // pred_check_branch
        %253 = sbr.rel (%p251) target = $region48
      $region47: #{tpu_custom_call.1} parent=5 // pred_region
        %s254 = ssub.s32 %s11, 2
      $region48: #{tpu_custom_call.1} parent=5 // pred_fallthru
        _
    $region6: #{tpu_custom_call.1} parent=1 // loop_footer
      %s15 = sadd.s32 1, %s11
    $region7: #{tpu_custom_call.1} parent=1 // loop_footer_branch
      %10 = sbr.rel target = $region3
    $region8: #{tpu_custom_call.1} parent=1 // loop_exit
      _
    %255 = vsyncpa [#allocation4], 1
    %s256 = scalar_lea.sflag [#allocation4], 1
    %257 = vsyncpa %s256, 1
    %258 = vsyncpa [#allocation5], 1
    %s259 = scalar_lea.sflag [#allocation5], 1
    %260 = vsyncpa %s259, 1

</llo_original>
